<compile_context>
chip_gen: v6e
topology: v6e:2x2x1
jax: 0.10.0
libtpu: 0.0.40
codegen_flags: <defaults>
</compile_context>

<pallas_src>
import functools

import jax
import jax.numpy as jnp
from jax.experimental import pallas as pl
from jax.experimental.pallas import tpu as pltpu


# ------------------------------ kernel -------------------------------------- #

def _fused_loss_kernel(xv_ref, x_ref, *rest,
                       hidden, n_vb, n_fb, tbv, tbf, first_fb,
                       row0, n_rows, n_victims, inv_v, inv_f):
    """Two-phase fused kernel.

    Phase A (grid steps [0, n_vb)):   accumulate sum(exp(x_victim)) into mean_acc.
    Phase B (grid steps [n_vb, end)): accumulate column-sum of fake rows of x
                                      (+ feature-entropy term when hidden).
    Finalize at the last step: scalar loss -> SMEM (1, 1) output.
    """
    if hidden:
        fg_ref, fo_ref, out_ref, mean_acc, colsum_acc, feat_acc = rest
    else:
        out_ref, mean_acc, colsum_acc = rest
        fg_ref = fo_ref = feat_acc = None

    i = pl.program_id(0)
    n_total = n_vb + n_fb

    @pl.when(i == 0)
    def _init():
        mean_acc[...] = jnp.zeros_like(mean_acc)
        colsum_acc[...] = jnp.zeros_like(colsum_acc)
        if hidden:
            feat_acc[...] = jnp.zeros_like(feat_acc)

    # ---------------- phase A: victim rows -> sum of exp(x) -------------------- #
    @pl.when(i < n_vb)
    def _victim_phase():
        rows = i * tbv + jax.lax.broadcasted_iota(jnp.int32, (tbv, 1), 0)
        valid = rows < n_victims                                    # mask padded rows
        ev = jnp.exp(xv_ref[...].astype(jnp.float32))               # EUP, whole tile
        mean_acc[...] += jnp.sum(jnp.where(valid, ev, 0.0), axis=0, keepdims=True)

    # ---------------- phase B: fake (last F) rows ------------------------------ #
    @pl.when(i >= n_vb)
    def _fake_phase():
        fb = first_fb + (i - n_vb)
        rows = fb * tbf + jax.lax.broadcasted_iota(jnp.int32, (tbf, 1), 0)
        valid = (rows >= row0) & (rows < n_rows)                    # only fake rows

        # log(exp(x)) == x, so the misclassification part is just a masked column sum.
        xblk = x_ref[...].astype(jnp.float32)
        colsum_acc[...] += jnp.sum(jnp.where(valid, xblk, 0.0), axis=0, keepdims=True)

        if hidden:
            fg = jnp.where(valid, fg_ref[...].astype(jnp.float32), 0.0)   # [TB, D]
            fo = jnp.where(valid, fo_ref[...].astype(jnp.float32), 1.0)   # [TB, D]
            d = fg.shape[1]
            ones_col = jnp.ones((d, 1), dtype=jnp.float32)
            # Row reductions on the otherwise-idle MXU: [TB, D] @ [D, 1].
            s = jnp.dot(fg, ones_col, preferred_element_type=jnp.float32)  # sum(fg, -1)
            s = jnp.where(s == 0.0, 1.0, s)
            inv = pl.reciprocal(s, approx=True)                     # EUP vrcp
            inv = inv * (2.0 - s * inv)                             # one Newton step
            prod = fg * jnp.log(fo + 1e-14)
            dots = jnp.dot(prod, ones_col, preferred_element_type=jnp.float32)
            # per-row: -(1/sum(fg)) * sum(fg * log(fo + eps)); accumulate block sum.
            feat_acc[...] += jnp.sum(-inv * dots, keepdims=True)

    @pl.when(i == n_total - 1)
    def _finalize():
        mean_v = mean_acc[...] * inv_v                              # [1, C]
        loss = -jnp.sum(mean_v * colsum_acc[...]) * inv_f
        if hidden:
            loss = loss + 0.1 * (jnp.sum(feat_acc[...]) * inv_f)
        out_ref[0, 0] = loss


# ------------------------------ wrapper -------------------------------------- #

def _pick_tile(full_rows, bytes_per_row):
    """Largest tile (<=512 rows, multiple of 8) whose double-buffered stream <=8MiB;
    use the full (possibly non-multiple-of-8) row count when it already fits."""
    cap = max(8, ((8 * 1024 * 1024 // max(1, 2 * bytes_per_row)) // 8) * 8)
    target = min(512, cap)
    return full_rows if full_rows <= target else target


@functools.partial(jax.jit, static_argnames=("num_fake_nodes", "hidden"))
def misclassification_loss(x, feature_orig, feature_gen, victim_nodes,
                           num_fake_nodes, hidden):
    N, C = x.shape
    D = feature_gen.shape[1]
    V = victim_nodes.shape[0]
    F = int(num_fake_nodes)
    row0 = N - F                                   # first fake row (static)

    # Arbitrary-index row gather is done once in XLA (cheap, V*C elements); the
    # exp + mean over the gathered rows happens inside the fused kernel (phase A).
    xv = jnp.take(x, victim_nodes.astype(jnp.int32), axis=0)        # [V, C]

    # --- tile sizing --------------------------------------------------------- #
    tbf = _pick_tile(N, 4 * (C + (2 * D if hidden else 0)))
    tbv = _pick_tile(V, 4 * C)

    n_vb = -(-V // tbv)                            # victim-phase blocks
    first_fb = row0 // tbf                         # first block touching a fake row
    n_fb = -(-N // tbf) - first_fb                 # fake-phase blocks
    n_total = n_vb + n_fb
    vb_last = n_vb - 1

    # index maps: during the "other" phase each spec returns a constant block index,
    # so the pipeline does not re-fetch it.
    def xv_map(i):
        return (jnp.minimum(i, vb_last), 0)

    def xfake_map(i):
        return (first_fb + jnp.maximum(i - n_vb, 0), 0)

    in_specs = [
        pl.BlockSpec((tbv, C), xv_map),            # gathered victim rows
        pl.BlockSpec((tbf, C), xfake_map),         # streamed tail blocks of x
    ]
    args = [xv, x]
    scratch = [
        pltpu.VMEM((1, C), jnp.float32),           # mean_acc: sum of exp over victims
        pltpu.VMEM((1, C), jnp.float32),           # colsum_acc over fake rows
    ]
    if hidden:
        in_specs += [pl.BlockSpec((tbf, D), xfake_map),
                     pl.BlockSpec((tbf, D), xfake_map)]
        args += [feature_gen, feature_orig]
        scratch += [pltpu.VMEM((1, 1), jnp.float32)]   # feature-entropy accumulator

    out = pl.pallas_call(
        functools.partial(_fused_loss_kernel, hidden=hidden,
                          n_vb=n_vb, n_fb=n_fb, tbv=tbv, tbf=tbf,
                          first_fb=first_fb, row0=row0, n_rows=N, n_victims=V,
                          inv_v=1.0 / V, inv_f=1.0 / F),
        out_shape=jax.ShapeDtypeStruct((1, 1), jnp.float32),
        grid=(n_total,),
        in_specs=in_specs,
        out_specs=pl.BlockSpec(memory_space=pltpu.MemorySpace.SMEM),
        scratch_shapes=scratch,
        compiler_params=pltpu.CompilerParams(
            dimension_semantics=("arbitrary",),
            vmem_limit_bytes=32 * 1024 * 1024),    # explicit, safe on v5e/v6e/v7x
    )(*args)
    return out[0, 0]


# ------------------------------ reference ------------------------------------ #

def _reference(x, feature_orig, feature_gen, victim_nodes, num_fake_nodes, hidden):
    logits = jnp.exp(x)
    score = -jnp.sum(
        jnp.mean(logits[victim_nodes], axis=0) * jnp.log(logits[-num_fake_nodes:]),
        axis=1)
    if hidden:
        sum_feat = jnp.sum(feature_gen, axis=1, keepdims=True)
        sum_feat = jnp.where(sum_feat == 0, 1.0, sum_feat)
        fg = feature_gen / sum_feat
        score_feature = -jnp.sum(
            fg[-num_fake_nodes:] * jnp.log(feature_orig[-num_fake_nodes:] + 1e-14),
            axis=1)
        return jnp.mean(score) + 0.1 * jnp.mean(score_feature)
    return jnp.mean(score)


if __name__ == "__main__":
    N, C, D = 16, 8, 32          # nodes, classes, feature dim
    num_fake_nodes = 4
    victim_nodes = jnp.array([0, 2, 5, 7], dtype=jnp.int32)

    key = jax.random.PRNGKey(0)
    kx, kfo, kfg = jax.random.split(key, 3)
    x = jax.random.normal(kx, (N, C), dtype=jnp.float32)             # log-logits
    feature_orig = jax.random.uniform(kfo, (N, D), dtype=jnp.float32)
    feature_gen = jax.random.uniform(kfg, (N, D), dtype=jnp.float32)

    for hidden in (True, False):
        out = misclassification_loss(x, feature_orig, feature_gen,
                                     victim_nodes, num_fake_nodes, hidden)
        out = jax.block_until_ready(out)
        ref = _reference(x, feature_orig, feature_gen,
                         victim_nodes, num_fake_nodes, hidden)
        assert jnp.allclose(out, ref, rtol=1e-5, atol=1e-5), (hidden, out, ref)

    print("KERNEL_OK")
</pallas_src>

<mosaic_0001>
module attributes {stable_mosaic.version = 11 : i64} {
  func.func @_fused_loss_kernel(%arg0: i32, %arg1: memref<4x8xf32, #tpu.memory_space<vmem>>, %arg2: memref<16x8xf32, #tpu.memory_space<vmem>>, %arg3: memref<16x32xf32, #tpu.memory_space<vmem>>, %arg4: memref<16x32xf32, #tpu.memory_space<vmem>>, %arg5: memref<1x1xf32, #tpu.memory_space<smem>>, %arg6: memref<1x8xf32, #tpu.memory_space<vmem>>, %arg7: memref<1x8xf32, #tpu.memory_space<vmem>>, %arg8: memref<1x1xf32, #tpu.memory_space<vmem>>) attributes {dimension_semantics = [#tpu.dimension_semantics<arbitrary>], iteration_bounds = array<i64: 2>, scalar_prefetch = 0 : i64, scratch_operands = 3 : i64, tpu.core_type = #tpu.core_type<tc>, window_params = [{transform_indices = @transform_0, window_bounds = array<i64: 4, 8>}, {transform_indices = @transform_1, window_bounds = array<i64: 16, 8>}, {transform_indices = @transform_2, window_bounds = array<i64: 16, 32>}, {transform_indices = @transform_3, window_bounds = array<i64: 16, 32>}, {transform_indices = @transform_4, window_bounds = array<i64: 1, 1>}]} {
    %c0_i32 = arith.constant 0 : i32
    %0 = arith.cmpi eq, %arg0, %c0_i32 : i32
    %1 = arith.extui %0 : i1 to i32
    %c0_i32_0 = arith.constant 0 : i32
    %2 = arith.cmpi ne, %1, %c0_i32_0 : i32
    scf.if %2 {
      %cst = arith.constant 0.000000e+00 : f32
      %12 = vector.broadcast %cst : f32 to vector<1x8xf32>
      %c0 = arith.constant 0 : index
      %c0_6 = arith.constant 0 : index
      %13 = vector.load %arg6[%c0, %c0_6] : memref<1x8xf32, #tpu.memory_space<vmem>>, vector<1x8xf32>
      tpu.vector_store %arg6[%c0, %c0_6], %12 {strides = array<i32>} : memref<1x8xf32, #tpu.memory_space<vmem>>, vector<1x8xf32>,
      %cst_7 = arith.constant 0.000000e+00 : f32
      %14 = vector.broadcast %cst_7 : f32 to vector<1x8xf32>
      %c0_8 = arith.constant 0 : index
      %c0_9 = arith.constant 0 : index
      %15 = vector.load %arg7[%c0_8, %c0_9] : memref<1x8xf32, #tpu.memory_space<vmem>>, vector<1x8xf32>
      tpu.vector_store %arg7[%c0_8, %c0_9], %14 {strides = array<i32>} : memref<1x8xf32, #tpu.memory_space<vmem>>, vector<1x8xf32>,
      %cst_10 = arith.constant 0.000000e+00 : f32
      %16 = vector.broadcast %cst_10 : f32 to vector<1x1xf32>
      %c0_11 = arith.constant 0 : index
      %c0_12 = arith.constant 0 : index
      %17 = vector.load %arg8[%c0_11, %c0_12] : memref<1x1xf32, #tpu.memory_space<vmem>>, vector<1x1xf32>
      tpu.vector_store %arg8[%c0_11, %c0_12], %16 {strides = array<i32>} : memref<1x1xf32, #tpu.memory_space<vmem>>, vector<1x1xf32>,
    } else {
    }
    %c1_i32 = arith.constant 1 : i32
    %3 = arith.cmpi slt, %arg0, %c1_i32 : i32
    %4 = arith.extui %3 : i1 to i32
    %c0_i32_1 = arith.constant 0 : i32
    %5 = arith.cmpi ne, %4, %c0_i32_1 : i32
    scf.if %5 {
      %c4_i32 = arith.constant 4 : i32
      %12 = arith.muli %arg0, %c4_i32 : i32
      %13 = tpu.iota {dimensions = array<i32: 0>} : vector<4x1xi32>
      %14 = vector.broadcast %12 : i32 to vector<4x1xi32>
      %15 = arith.addi %14, %13 : vector<4x1xi32>
      %c4_i32_6 = arith.constant 4 : i32
      %16 = vector.broadcast %c4_i32_6 : i32 to vector<4x1xi32>
      %17 = arith.cmpi slt, %15, %16 : vector<4x1xi32>
      %c0 = arith.constant 0 : index
      %c0_7 = arith.constant 0 : index
      %18 = vector.load %arg1[%c0, %c0_7] : memref<4x8xf32, #tpu.memory_space<vmem>>, vector<4x8xf32>
      %19 = math.exp %18 : vector<4x8xf32>
      %c0_8 = arith.constant 0 : index
      %c0_9 = arith.constant 0 : index
      %20 = vector.load %arg6[%c0_8, %c0_9] : memref<1x8xf32, #tpu.memory_space<vmem>>, vector<1x8xf32>
      %cst = arith.constant 0.000000e+00 : f32
      %21 = vector.shape_cast %17 : vector<4x1xi1> to vector<4x1xi1>
      %22 = vector.broadcast %21 : vector<4x1xi1> to vector<4x8xi1>
      %23 = vector.broadcast %cst : f32 to vector<4x8xf32>
      %24 = arith.select %22, %19, %23 : vector<4x8xi1>, vector<4x8xf32>
      %cst_10 = arith.constant dense<0.000000e+00> : vector<8xf32>
      %25 = vector.multi_reduction <add>, %24, %cst_10 [0] : vector<4x8xf32> to vector<8xf32>
      %26 = vector.shape_cast %25 : vector<8xf32> to vector<1x8xf32>
      %27 = arith.addf %20, %26 : vector<1x8xf32>
      %c0_11 = arith.constant 0 : index
      %c0_12 = arith.constant 0 : index
      %28 = vector.load %arg6[%c0_11, %c0_12] : memref<1x8xf32, #tpu.memory_space<vmem>>, vector<1x8xf32>
      tpu.vector_store %arg6[%c0_11, %c0_12], %27 {strides = array<i32>} : memref<1x8xf32, #tpu.memory_space<vmem>>, vector<1x8xf32>,
    } else {
    }
    %c1_i32_2 = arith.constant 1 : i32
    %6 = arith.cmpi sge, %arg0, %c1_i32_2 : i32
    %7 = arith.extui %6 : i1 to i32
    %c0_i32_3 = arith.constant 0 : i32
    %8 = arith.cmpi ne, %7, %c0_i32_3 : i32
    scf.if %8 {
      %c1_i32_6 = arith.constant 1 : i32
      %12 = arith.subi %arg0, %c1_i32_6 : i32
      %c0_i32_7 = arith.constant 0 : i32
      %13 = arith.addi %c0_i32_7, %12 : i32
      %c16_i32 = arith.constant 16 : i32
      %14 = arith.muli %13, %c16_i32 : i32
      %15 = tpu.iota {dimensions = array<i32: 0>} : vector<16x1xi32>
      %16 = vector.broadcast %14 : i32 to vector<16x1xi32>
      %17 = arith.addi %16, %15 : vector<16x1xi32>
      %c12_i32 = arith.constant 12 : i32
      %18 = vector.broadcast %c12_i32 : i32 to vector<16x1xi32>
      %19 = arith.cmpi sge, %17, %18 : vector<16x1xi32>
      %c16_i32_8 = arith.constant 16 : i32
      %20 = vector.broadcast %c16_i32_8 : i32 to vector<16x1xi32>
      %21 = arith.cmpi slt, %17, %20 : vector<16x1xi32>
      %22 = arith.andi %19, %21 : vector<16x1xi1>
      %c0 = arith.constant 0 : index
      %c0_9 = arith.constant 0 : index
      %23 = vector.load %arg2[%c0, %c0_9] : memref<16x8xf32, #tpu.memory_space<vmem>>, vector<16x8xf32>
      %c0_10 = arith.constant 0 : index
      %c0_11 = arith.constant 0 : index
      %24 = vector.load %arg7[%c0_10, %c0_11] : memref<1x8xf32, #tpu.memory_space<vmem>>, vector<1x8xf32>
      %cst = arith.constant 0.000000e+00 : f32
      %25 = vector.shape_cast %22 : vector<16x1xi1> to vector<16x1xi1>
      %26 = vector.broadcast %25 : vector<16x1xi1> to vector<16x8xi1>
      %27 = vector.broadcast %cst : f32 to vector<16x8xf32>
      %28 = arith.select %26, %23, %27 : vector<16x8xi1>, vector<16x8xf32>
      %cst_12 = arith.constant dense<0.000000e+00> : vector<8xf32>
      %29 = vector.multi_reduction <add>, %28, %cst_12 [0] : vector<16x8xf32> to vector<8xf32>
      %30 = vector.shape_cast %29 : vector<8xf32> to vector<1x8xf32>
      %31 = arith.addf %24, %30 : vector<1x8xf32>
      %c0_13 = arith.constant 0 : index
      %c0_14 = arith.constant 0 : index
      %32 = vector.load %arg7[%c0_13, %c0_14] : memref<1x8xf32, #tpu.memory_space<vmem>>, vector<1x8xf32>
      tpu.vector_store %arg7[%c0_13, %c0_14], %31 {strides = array<i32>} : memref<1x8xf32, #tpu.memory_space<vmem>>, vector<1x8xf32>,
      %c0_15 = arith.constant 0 : index
      %c0_16 = arith.constant 0 : index
      %33 = vector.load %arg3[%c0_15, %c0_16] : memref<16x32xf32, #tpu.memory_space<vmem>>, vector<16x32xf32>
      %cst_17 = arith.constant 0.000000e+00 : f32
      %34 = vector.shape_cast %22 : vector<16x1xi1> to vector<16x1xi1>
      %35 = vector.broadcast %34 : vector<16x1xi1> to vector<16x32xi1>
      %36 = vector.broadcast %cst_17 : f32 to vector<16x32xf32>
      %37 = arith.select %35, %33, %36 : vector<16x32xi1>, vector<16x32xf32>
      %c0_18 = arith.constant 0 : index
      %c0_19 = arith.constant 0 : index
      %38 = vector.load %arg4[%c0_18, %c0_19] : memref<16x32xf32, #tpu.memory_space<vmem>>, vector<16x32xf32>
      %cst_20 = arith.constant 1.000000e+00 : f32
      %39 = vector.shape_cast %22 : vector<16x1xi1> to vector<16x1xi1>
      %40 = vector.broadcast %39 : vector<16x1xi1> to vector<16x32xi1>
      %41 = vector.broadcast %cst_20 : f32 to vector<16x32xf32>
      %42 = arith.select %40, %38, %41 : vector<16x32xi1>, vector<16x32xf32>
      %cst_21 = arith.constant 1.000000e+00 : f32
      %43 = vector.broadcast %cst_21 : f32 to vector<32x1xf32>
      %cst_22 = arith.constant dense<0.000000e+00> : vector<16x1xf32>
      %44 = tpu.matmul %37, %43, %cst_22 {dimension_numbers = #tpu.dot_dimension_numbers<[1], [0], [0], [1], [0, 0, 1, 1], [], []>} : vector<16x32xf32>, vector<32x1xf32>, vector<16x1xf32> -> vector<16x1xf32>
      %cst_23 = arith.constant 0.000000e+00 : f32
      %45 = vector.broadcast %cst_23 : f32 to vector<16x1xf32>
      %46 = arith.cmpf oeq, %44, %45 : vector<16x1xf32>
      %cst_24 = arith.constant 1.000000e+00 : f32
      %47 = vector.broadcast %cst_24 : f32 to vector<16x1xf32>
      %48 = arith.select %46, %47, %44 : vector<16x1xi1>, vector<16x1xf32>
      %49 = tpu.reciprocal %48 {approx = true} : vector<16x1xf32> -> vector<16x1xf32>
      %50 = arith.mulf %48, %49 : vector<16x1xf32>
      %cst_25 = arith.constant 2.000000e+00 : f32
      %51 = vector.broadcast %cst_25 : f32 to vector<16x1xf32>
      %52 = arith.subf %51, %50 : vector<16x1xf32>
      %53 = arith.mulf %49, %52 : vector<16x1xf32>
      %cst_26 = arith.constant 9.99999982E-15 : f32
      %54 = vector.broadcast %cst_26 : f32 to vector<16x32xf32>
      %55 = arith.addf %42, %54 : vector<16x32xf32>
      %56 = math.log %55 : vector<16x32xf32>
      %57 = arith.mulf %37, %56 : vector<16x32xf32>
      %cst_27 = arith.constant dense<0.000000e+00> : vector<16x1xf32>
      %58 = tpu.matmul %57, %43, %cst_27 {dimension_numbers = #tpu.dot_dimension_numbers<[1], [0], [0], [1], [0, 0, 1, 1], [], []>} : vector<16x32xf32>, vector<32x1xf32>, vector<16x1xf32> -> vector<16x1xf32>
      %c0_28 = arith.constant 0 : index
      %c0_29 = arith.constant 0 : index
      %59 = vector.load %arg8[%c0_28, %c0_29] : memref<1x1xf32, #tpu.memory_space<vmem>>, vector<1x1xf32>
      %cst_30 = arith.constant 0.000000e+00 : f32
      %60 = vector.broadcast %cst_30 : f32 to vector<16x1xf32>
      %61 = arith.subf %60, %53 : vector<16x1xf32>
      %62 = arith.mulf %61, %58 : vector<16x1xf32>
      %63 = vector.shape_cast %62 : vector<16x1xf32> to vector<1x16x1xf32>
      %cst_31 = arith.constant dense<0.000000e+00> : vector<1xf32>
      %64 = vector.multi_reduction <add>, %63, %cst_31 [1, 2] : vector<1x16x1xf32> to vector<1xf32>
      %65 = vector.shape_cast %64 : vector<1xf32> to vector<1x1x1xf32>
      %66 = vector.extract %65[0, 0, 0] : f32 from vector<1x1x1xf32>
      %67 = vector.broadcast %66 : f32 to vector<1x1xf32>
      %68 = arith.addf %59, %67 : vector<1x1xf32>
      %c0_32 = arith.constant 0 : index
      %c0_33 = arith.constant 0 : index
      %69 = vector.load %arg8[%c0_32, %c0_33] : memref<1x1xf32, #tpu.memory_space<vmem>>, vector<1x1xf32>
      tpu.vector_store %arg8[%c0_32, %c0_33], %68 {strides = array<i32>} : memref<1x1xf32, #tpu.memory_space<vmem>>, vector<1x1xf32>,
    } else {
    }
    %c1_i32_4 = arith.constant 1 : i32
    %9 = arith.cmpi eq, %arg0, %c1_i32_4 : i32
    %10 = arith.extui %9 : i1 to i32
    %c0_i32_5 = arith.constant 0 : i32
    %11 = arith.cmpi ne, %10, %c0_i32_5 : i32
    scf.if %11 {
      %c0 = arith.constant 0 : index
      %c0_6 = arith.constant 0 : index
      %12 = vector.load %arg6[%c0, %c0_6] : memref<1x8xf32, #tpu.memory_space<vmem>>, vector<1x8xf32>
      %cst = arith.constant 2.500000e-01 : f32
      %13 = vector.broadcast %cst : f32 to vector<1x8xf32>
      %14 = arith.mulf %12, %13 : vector<1x8xf32>
      %c0_7 = arith.constant 0 : index
      %c0_8 = arith.constant 0 : index
      %15 = vector.load %arg7[%c0_7, %c0_8] : memref<1x8xf32, #tpu.memory_space<vmem>>, vector<1x8xf32>
      %16 = arith.mulf %14, %15 : vector<1x8xf32>
      %17 = vector.shape_cast %16 : vector<1x8xf32> to vector<1x1x8xf32>
      %cst_9 = arith.constant dense<0.000000e+00> : vector<1xf32>
      %18 = vector.multi_reduction <add>, %17, %cst_9 [1, 2] : vector<1x1x8xf32> to vector<1xf32>
      %19 = vector.shape_cast %18 : vector<1xf32> to vector<1x1x1xf32>
      %20 = vector.extract %19[0, 0, 0] : f32 from vector<1x1x1xf32>
      %cst_10 = arith.constant 0.000000e+00 : f32
      %21 = arith.subf %cst_10, %20 : f32
      %cst_11 = arith.constant 2.500000e-01 : f32
      %22 = arith.mulf %21, %cst_11 : f32
      %c0_12 = arith.constant 0 : index
      %c0_13 = arith.constant 0 : index
      %23 = vector.load %arg8[%c0_12, %c0_13] : memref<1x1xf32, #tpu.memory_space<vmem>>, vector<1x1xf32>
      %24 = vector.shape_cast %23 : vector<1x1xf32> to vector<1x1x1xf32>
      %cst_14 = arith.constant dense<0.000000e+00> : vector<1xf32>
      %25 = vector.multi_reduction <add>, %24, %cst_14 [1, 2] : vector<1x1x1xf32> to vector<1xf32>
      %26 = vector.shape_cast %25 : vector<1xf32> to vector<1x1x1xf32>
      %27 = vector.extract %26[0, 0, 0] : f32 from vector<1x1x1xf32>
      %cst_15 = arith.constant 2.500000e-01 : f32
      %28 = arith.mulf %27, %cst_15 : f32
      %cst_16 = arith.constant 1.000000e-01 : f32
      %29 = arith.mulf %cst_16, %28 : f32
      %30 = arith.addf %22, %29 : f32
      %c0_17 = arith.constant 0 : index
      %c0_18 = arith.constant 0 : index
      %31 = memref.load %arg5[%c0_17, %c0_18] : memref<1x1xf32, #tpu.memory_space<smem>>
      memref.store %30, %arg5[%c0_17, %c0_18] : memref<1x1xf32, #tpu.memory_space<smem>>
    } else {
    }
    return
  }
  func.func @transform_0(%arg0: i32) -> (i32, i32) {
    %c0_i32 = arith.constant 0 : i32
    %0 = arith.minsi %arg0, %c0_i32 : i32
    %c0_i32_0 = arith.constant 0 : i32
    %c0_i32_1 = arith.constant 0 : i32
    return %0, %c0_i32_0 : i32, i32
  }
  func.func @transform_1(%arg0: i32) -> (i32, i32) {
    %c1_i32 = arith.constant 1 : i32
    %0 = arith.subi %arg0, %c1_i32 : i32
    %c0_i32 = arith.constant 0 : i32
    %1 = arith.maxsi %0, %c0_i32 : i32
    %c0_i32_0 = arith.constant 0 : i32
    %2 = arith.addi %c0_i32_0, %1 : i32
    %c0_i32_1 = arith.constant 0 : i32
    %c0_i32_2 = arith.constant 0 : i32
    return %2, %c0_i32_1 : i32, i32
  }
  func.func @transform_2(%arg0: i32) -> (i32, i32) {
    %c1_i32 = arith.constant 1 : i32
    %0 = arith.subi %arg0, %c1_i32 : i32
    %c0_i32 = arith.constant 0 : i32
    %1 = arith.maxsi %0, %c0_i32 : i32
    %c0_i32_0 = arith.constant 0 : i32
    %2 = arith.addi %c0_i32_0, %1 : i32
    %c0_i32_1 = arith.constant 0 : i32
    %c0_i32_2 = arith.constant 0 : i32
    return %2, %c0_i32_1 : i32, i32
  }
  func.func @transform_3(%arg0: i32) -> (i32, i32) {
    %c1_i32 = arith.constant 1 : i32
    %0 = arith.subi %arg0, %c1_i32 : i32
    %c0_i32 = arith.constant 0 : i32
    %1 = arith.maxsi %0, %c0_i32 : i32
    %c0_i32_0 = arith.constant 0 : i32
    %2 = arith.addi %c0_i32_0, %1 : i32
    %c0_i32_1 = arith.constant 0 : i32
    %c0_i32_2 = arith.constant 0 : i32
    return %2, %c0_i32_1 : i32, i32
  }
  func.func @transform_4(%arg0: i32) -> (i32, i32) {
    %c0_i32 = arith.constant 0 : i32
    %c0_i32_0 = arith.constant 0 : i32
    %c0_i32_1 = arith.constant 0 : i32
    return %c0_i32, %c0_i32_0 : i32, i32
  }
}

</mosaic_0001>

<llo_original>
// kernel: misclassification_loss.1
$region0: #{misclassification_loss.1}
  #allocation0 [shape = 'u32[]', space=smem, size = 0x4, offset = 0x4, fixed_abs, tag = 'smem constant byte address 0x4 - core index']
  #allocation1 [shape = 'u32[144,128]{1,0:T(1,128)}', space=vmem, size = 0x12000, scoped, tag = 'internal scratch']
  #allocation2 [shape = 'f32[1,8]{1,0:T(1,128)}', space=vmem, size = 0x200, scoped, tag = 'scratch operand']
  #allocation3 [shape = 'f32[1,8]{1,0:T(1,128)}', space=vmem, size = 0x200, scoped, tag = 'scratch operand']
  #allocation4 [shape = 'f32[1,1]{1,0:T(1,128)}', space=vmem, size = 0x200, scoped, tag = 'scratch operand']
  %s0 = inlined_call_operand.vmem [shape: f32[4,8], index: 0, kind: input, shape index: {}]
  %s1 = inlined_call_operand.vmem [shape: f32[16,8], index: 1, kind: input, shape index: {}]
  %s2 = inlined_call_operand.vmem [shape: f32[16,32], index: 2, kind: input, shape index: {}]
  %s3 = inlined_call_operand.vmem [shape: f32[16,32], index: 3, kind: input, shape index: {}]
  %s4 = inlined_call_operand.hbm [shape: f32[1,1], index: 4, kind: output, shape index: {}]
  %s5 = sld [smem:[#allocation0]]
  $region65: #{misclassification_loss.1} parent=0
    _
  %s7 = ssub.s32 1, %s5
  %s8 = scalar_select 0, %s7, %s5
  $region1: #{misclassification_loss.1} parent=0
    #allocation5 [shape = 'u8[512]{0}', space=smem, size = 0x200, scoped, tag = 'output window, operand 0, single buffered']
    #allocation6 [shape = 's32[2]{0}', space=sflag, size = 0x8, scoped, tag = 'scoped memory for misclassification_loss.1']
    %9 = vsyncpa [#allocation6], 0
    loop: start=0, step=1, limit=4
    $region2: #{misclassification_loss.1} parent=1 // loop_pre_header
      _
    $region3: #{misclassification_loss.1} parent=1 // loop_header
      %s11 = sphi 0, %s15
      %p12 = scmp.ge.s32.totalorder %s11, 4
      %s25 = sphi 0, %s27
      %s28 = sphi 0, %s25
      %s29 = sphi 0, %s28
      %s45 = sphi 0, %s29
      %s57 = sphi 0, %s59
      %s60 = sphi 0, %s57
      %s61 = sphi 0, %s60
      %s77 = sphi 0, %s61
      %s89 = sphi 0, %s91
      %s92 = sphi 0, %s89
      %s93 = sphi 0, %s92
      %s109 = sphi 0, %s93
      %s121 = sphi 0, %s123
      %s124 = sphi 0, %s121
      %s125 = sphi 0, %s124
      %s141 = sphi 0, %s125
      %s145 = sphi 0, %s145
      %s147 = sphi 0, %s145
      %s148 = sphi 0, %s147
      %s162 = sphi 0, %s148
    $region4: #{misclassification_loss.1} parent=1 // loop_header_branch
      %14 = sbr.rel (%p12) target = $region8
    $region5: #{misclassification_loss.1} parent=1 // loop_body
      %s16 = ssub.s32 %s11, 1
      %s17 = ssub.s32 %s11, 2
      %s18 = sadd.s32 %s11, 1
      %p19 = scmp.lt.s32.totalorder %s11, 0
      %s20 = scalar_select %p19, %s11, 0
      %p21 = scmp.lt.s32.totalorder %s18, 0
      %s22 = scalar_select %p21, %s18, 0
      %s23 = ssub.s32 %s20, %s22
      %p24 = scmp.eq.s32.totalorder %s23, 0
      %s26 = sadd.s32 %s25, 1
      %s27 = scalar_select %p24, %s25, %s26
      %p30 = pneg %p24
      %p31 = scmp.eq.s32.totalorder %s11, 1
      %p32 = por %p30, %p31
      %p33 = scmp.ne.s32.totalorder %s25, %s28
      %p34 = scmp.eq.s32.totalorder %s11, 0
      %p35 = por %p33, %p34
      %p36 = scmp.ne.s32.totalorder %s25, %s28
      %p37 = scmp.eq.s32.totalorder %s16, 1
      %p38 = por %p36, %p37
      %p39 = scmp.ne.s32.totalorder %s28, %s29
      %p40 = scmp.eq.s32.totalorder %s16, 0
      %p41 = por %p39, %p40
      %p42 = scmp.ne.s32.totalorder %s28, %s29
      %p43 = scmp.eq.s32.totalorder %s17, 1
      %p44 = por %p42, %p43
      %p46 = scmp.ne.s32.totalorder %s29, %s45
      %p47 = scmp.eq.s32.totalorder %s17, 0
      %p48 = por %p46, %p47
      %s49 = ssub.s32 %s11, 1
      %p50 = scmp.gt.s32.totalorder %s49, 0
      %s51 = scalar_select %p50, %s49, 0
      %s52 = ssub.s32 %s18, 1
      %p53 = scmp.gt.s32.totalorder %s52, 0
      %s54 = scalar_select %p53, %s52, 0
      %s55 = ssub.s32 %s51, %s54
      %p56 = scmp.eq.s32.totalorder %s55, 0
      %s58 = sadd.s32 %s57, 1
      %s59 = scalar_select %p56, %s57, %s58
      %p62 = pneg %p56
      %p63 = scmp.eq.s32.totalorder %s11, 1
      %p64 = por %p62, %p63
      %p65 = scmp.ne.s32.totalorder %s57, %s60
      %p66 = scmp.eq.s32.totalorder %s11, 0
      %p67 = por %p65, %p66
      %p68 = scmp.ne.s32.totalorder %s57, %s60
      %p69 = scmp.eq.s32.totalorder %s16, 1
      %p70 = por %p68, %p69
      %p71 = scmp.ne.s32.totalorder %s60, %s61
      %p72 = scmp.eq.s32.totalorder %s16, 0
      %p73 = por %p71, %p72
      %p74 = scmp.ne.s32.totalorder %s60, %s61
      %p75 = scmp.eq.s32.totalorder %s17, 1
      %p76 = por %p74, %p75
      %p78 = scmp.ne.s32.totalorder %s61, %s77
      %p79 = scmp.eq.s32.totalorder %s17, 0
      %p80 = por %p78, %p79
      %s81 = ssub.s32 %s11, 1
      %p82 = scmp.gt.s32.totalorder %s81, 0
      %s83 = scalar_select %p82, %s81, 0
      %s84 = ssub.s32 %s18, 1
      %p85 = scmp.gt.s32.totalorder %s84, 0
      %s86 = scalar_select %p85, %s84, 0
      %s87 = ssub.s32 %s83, %s86
      %p88 = scmp.eq.s32.totalorder %s87, 0
      %s90 = sadd.s32 %s89, 1
      %s91 = scalar_select %p88, %s89, %s90
      %p94 = pneg %p88
      %p95 = scmp.eq.s32.totalorder %s11, 1
      %p96 = por %p94, %p95
      %p97 = scmp.ne.s32.totalorder %s89, %s92
      %p98 = scmp.eq.s32.totalorder %s11, 0
      %p99 = por %p97, %p98
      %p100 = scmp.ne.s32.totalorder %s89, %s92
      %p101 = scmp.eq.s32.totalorder %s16, 1
      %p102 = por %p100, %p101
      %p103 = scmp.ne.s32.totalorder %s92, %s93
      %p104 = scmp.eq.s32.totalorder %s16, 0
      %p105 = por %p103, %p104
      %p106 = scmp.ne.s32.totalorder %s92, %s93
      %p107 = scmp.eq.s32.totalorder %s17, 1
      %p108 = por %p106, %p107
      %p110 = scmp.ne.s32.totalorder %s93, %s109
      %p111 = scmp.eq.s32.totalorder %s17, 0
      %p112 = por %p110, %p111
      %s113 = ssub.s32 %s11, 1
      %p114 = scmp.gt.s32.totalorder %s113, 0
      %s115 = scalar_select %p114, %s113, 0
      %s116 = ssub.s32 %s18, 1
      %p117 = scmp.gt.s32.totalorder %s116, 0
      %s118 = scalar_select %p117, %s116, 0
      %s119 = ssub.s32 %s115, %s118
      %p120 = scmp.eq.s32.totalorder %s119, 0
      %s122 = sadd.s32 %s121, 1
      %s123 = scalar_select %p120, %s121, %s122
      %p126 = pneg %p120
      %p127 = scmp.eq.s32.totalorder %s11, 1
      %p128 = por %p126, %p127
      %p129 = scmp.ne.s32.totalorder %s121, %s124
      %p130 = scmp.eq.s32.totalorder %s11, 0
      %p131 = por %p129, %p130
      %p132 = scmp.ne.s32.totalorder %s121, %s124
      %p133 = scmp.eq.s32.totalorder %s16, 1
      %p134 = por %p132, %p133
      %p135 = scmp.ne.s32.totalorder %s124, %s125
      %p136 = scmp.eq.s32.totalorder %s16, 0
      %p137 = por %p135, %p136
      %p138 = scmp.ne.s32.totalorder %s124, %s125
      %p139 = scmp.eq.s32.totalorder %s17, 1
      %p140 = por %p138, %p139
      %p142 = scmp.ne.s32.totalorder %s125, %s141
      %p143 = scmp.eq.s32.totalorder %s17, 0
      %p144 = por %p142, %p143
      %s146 = sadd.s32 %s145, 1
      %p149 = scmp.eq.s32.totalorder %s11, 1
      %p150 = scmp.ne.s32.totalorder %s145, %s147
      %p151 = scmp.eq.s32.totalorder %s11, 0
      %p152 = por %p150, %p151
      %p153 = scmp.ne.s32.totalorder %s145, %s147
      %p154 = scmp.eq.s32.totalorder %s16, 1
      %p155 = por %p153, %p154
      %p156 = scmp.ne.s32.totalorder %s147, %s148
      %p157 = scmp.eq.s32.totalorder %s16, 0
      %p158 = por %p156, %p157
      %p159 = scmp.ne.s32.totalorder %s147, %s148
      %p160 = scmp.eq.s32.totalorder %s17, 1
      %p161 = por %p159, %p160
      %p163 = scmp.ne.s32.totalorder %s148, %s162
      %p164 = scmp.eq.s32.totalorder %s17, 0
      %p165 = por %p163, %p164
      %p166 = scmp.le.s32.totalorder 1, %s11
      %p167 = scmp.lt.s32.totalorder %s11, 3
      %p168 = pnand %p166, %p167
      %p169 = pneg %p168
      // Predicated region
      $region9: #{misclassification_loss.1} parent=5 // pred_check
        _
      $region10: #{misclassification_loss.1} parent=5 // pred_check_branch
        %171 = sbr.rel (%p168) target = $region12
      $region11: #{misclassification_loss.1} parent=5 // pred_region
        %s172 = ssub.s32 %s11, 1
      $region12: #{misclassification_loss.1} parent=5 // pred_fallthru
        _
      %p173 = scmp.lt.s32.totalorder %s11, 2
      // Predicated region
      $region13: #{misclassification_loss.1} parent=5 // pred_check
        %p174 = pneg %p173
      $region14: #{misclassification_loss.1} parent=5 // pred_check_branch
        %176 = sbr.rel (%p174) target = $region16
      $region15: #{misclassification_loss.1} parent=5 // pred_region
        // Predicated region
        $region17: #{misclassification_loss.1} parent=15 // pred_check
          %p177 = pneg %p35
        $region18: #{misclassification_loss.1} parent=15 // pred_check_branch
          %179 = sbr.rel (%p177) target = $region20
        $region19: #{misclassification_loss.1} parent=15 // pred_region
          %p180 = scmp.lt.s32.totalorder %s11, 0
          %s181 = scalar_select %p180, %s11, 0
          %p182 = scmp.lt.s32.totalorder %s181, 0
          %s183 = scalar_select %p182, %s181, 0
          %s184 = smul.addr %s183, 4
          %s185 = scalar_lea.vmem %s0, %s184
          %p186 = scmp.lt.s32.totalorder %s11, 0
          %s187 = scalar_select %p186, %s11, 0
        $region20: #{misclassification_loss.1} parent=15 // pred_fallthru
          _
        // Predicated region
        $region21: #{misclassification_loss.1} parent=15 // pred_check
          %p188 = pneg %p67
        $region22: #{misclassification_loss.1} parent=15 // pred_check_branch
          %190 = sbr.rel (%p188) target = $region24
        $region23: #{misclassification_loss.1} parent=15 // pred_region
          %s191 = ssub.s32 %s11, 1
          %p192 = scmp.gt.s32.totalorder %s191, 0
          %s193 = scalar_select %p192, %s191, 0
          %s194 = smul.u32 2, %s193
          %p195 = scmp.lt.s32.totalorder %s194, 1
          %s196 = scalar_select %p195, %s194, 1
          %s197 = smul.addr %s196, 8
          %s198 = scalar_lea.vmem %s1, %s197
          %s199 = ssub.s32 %s11, 1
          %p200 = scmp.gt.s32.totalorder %s199, 0
          %s201 = scalar_select %p200, %s199, 0
          %s202 = smul.u32 2, %s201
        $region24: #{misclassification_loss.1} parent=15 // pred_fallthru
          _
        // Predicated region
        $region25: #{misclassification_loss.1} parent=15 // pred_check
          %p203 = pneg %p99
        $region26: #{misclassification_loss.1} parent=15 // pred_check_branch
          %205 = sbr.rel (%p203) target = $region28
        $region27: #{misclassification_loss.1} parent=15 // pred_region
          %s206 = ssub.s32 %s11, 1
          %p207 = scmp.gt.s32.totalorder %s206, 0
          %s208 = scalar_select %p207, %s206, 0
          %s209 = smul.u32 2, %s208
          %p210 = scmp.lt.s32.totalorder %s209, 1
          %s211 = scalar_select %p210, %s209, 1
          %s212 = smul.addr %s211, 8
          %s213 = scalar_lea.vmem %s2, %s212
          %s214 = ssub.s32 %s11, 1
          %p215 = scmp.gt.s32.totalorder %s214, 0
          %s216 = scalar_select %p215, %s214, 0
          %s217 = smul.u32 2, %s216
        $region28: #{misclassification_loss.1} parent=15 // pred_fallthru
          _
        // Predicated region
        $region29: #{misclassification_loss.1} parent=15 // pred_check
          %p218 = pneg %p131
        $region30: #{misclassification_loss.1} parent=15 // pred_check_branch
          %220 = sbr.rel (%p218) target = $region32
        $region31: #{misclassification_loss.1} parent=15 // pred_region
          %s221 = ssub.s32 %s11, 1
          %p222 = scmp.gt.s32.totalorder %s221, 0
          %s223 = scalar_select %p222, %s221, 0
          %s224 = smul.u32 2, %s223
          %p225 = scmp.lt.s32.totalorder %s224, 1
          %s226 = scalar_select %p225, %s224, 1
          %s227 = smul.addr %s226, 8
          %s228 = scalar_lea.vmem %s3, %s227
          %s229 = ssub.s32 %s11, 1
          %p230 = scmp.gt.s32.totalorder %s229, 0
          %s231 = scalar_select %p230, %s229, 0
          %s232 = smul.u32 2, %s231
        $region32: #{misclassification_loss.1} parent=15 // pred_fallthru
          _
      $region16: #{misclassification_loss.1} parent=5 // pred_fallthru
        _
      %p233 = scmp.le.s32.totalorder 1, %s11
      %p234 = scmp.lt.s32.totalorder %s11, 3
      %p235 = pnand %p233, %p234
      %p236 = pneg %p235
      // Predicated region
      $region33: #{misclassification_loss.1} parent=5 // pred_check
        _
      $region34: #{misclassification_loss.1} parent=5 // pred_check_branch
        %238 = sbr.rel (%p235) target = $region36
      $region35: #{misclassification_loss.1} parent=5 // pred_region
        %s239 = ssub.s32 %s11, 1
        %p240 = scmp.lt.s32.totalorder %s16, 0
        %s241 = scalar_select %p240, %s16, 0
        %p242 = scmp.lt.s32.totalorder %s241, 0
        %s243 = scalar_select %p242, %s241, 0
        %s244 = smul.addr %s243, 4
        %s245 = scalar_lea.vmem %s0, %s244
        %p246 = pneg %p41
        %p247 = pneg %p38
        %s248 = ssub.s32 %s16, 1
        %p249 = scmp.gt.s32.totalorder %s248, 0
        %s250 = scalar_select %p249, %s248, 0
        %s251 = smul.u32 2, %s250
        %p252 = scmp.lt.s32.totalorder %s251, 1
        %s253 = scalar_select %p252, %s251, 1
        %s254 = smul.addr %s253, 8
        %s255 = scalar_lea.vmem %s1, %s254
        %p256 = pneg %p73
        %p257 = pneg %p70
        %s258 = ssub.s32 %s16, 1
        %p259 = scmp.gt.s32.totalorder %s258, 0
        %s260 = scalar_select %p259, %s258, 0
        %s261 = smul.u32 2, %s260
        %p262 = scmp.lt.s32.totalorder %s261, 1
        %s263 = scalar_select %p262, %s261, 1
        %s264 = smul.addr %s263, 8
        %s265 = scalar_lea.vmem %s2, %s264
        %p266 = pneg %p105
        %p267 = pneg %p102
        %s268 = ssub.s32 %s16, 1
        %p269 = scmp.gt.s32.totalorder %s268, 0
        %s270 = scalar_select %p269, %s268, 0
        %s271 = smul.u32 2, %s270
        %p272 = scmp.lt.s32.totalorder %s271, 1
        %s273 = scalar_select %p272, %s271, 1
        %s274 = smul.addr %s273, 8
        %s275 = scalar_lea.vmem %s3, %s274
        %p276 = pneg %p137
        %p277 = pneg %p134
        %p278 = pneg %p158
        %p279 = pneg %p155
        %p280 = scmp.lt.s32.totalorder %s16, 0
        %s281 = scalar_select %p280, %s16, 0
        %p282 = scmp.lt.s32.totalorder %s281, 0
        %s283 = scalar_select %p282, %s281, 0
        %s284 = smul.addr %s283, 4
        %s285 = scalar_lea.vmem %s0, %s284
        %p286 = scmp.lt.s32.totalorder %s16, 0
        %s287 = scalar_select %p286, %s16, 0
        %s288 = ssub.s32 %s16, 1
        %p289 = scmp.gt.s32.totalorder %s288, 0
        %s290 = scalar_select %p289, %s288, 0
        %s291 = smul.u32 2, %s290
        %p292 = scmp.lt.s32.totalorder %s291, 1
        %s293 = scalar_select %p292, %s291, 1
        %s294 = smul.addr %s293, 8
        %s295 = scalar_lea.vmem %s1, %s294
        %s296 = ssub.s32 %s16, 1
        %p297 = scmp.gt.s32.totalorder %s296, 0
        %s298 = scalar_select %p297, %s296, 0
        %s299 = smul.u32 2, %s298
        %s300 = ssub.s32 %s16, 1
        %p301 = scmp.gt.s32.totalorder %s300, 0
        %s302 = scalar_select %p301, %s300, 0
        %s303 = smul.u32 2, %s302
        %p304 = scmp.lt.s32.totalorder %s303, 1
        %s305 = scalar_select %p304, %s303, 1
        %s306 = smul.addr %s305, 8
        %s307 = scalar_lea.vmem %s2, %s306
        %s308 = ssub.s32 %s16, 1
        %p309 = scmp.gt.s32.totalorder %s308, 0
        %s310 = scalar_select %p309, %s308, 0
        %s311 = smul.u32 2, %s310
        %s312 = ssub.s32 %s16, 1
        %p313 = scmp.gt.s32.totalorder %s312, 0
        %s314 = scalar_select %p313, %s312, 0
        %s315 = smul.u32 2, %s314
        %p316 = scmp.lt.s32.totalorder %s315, 1
        %s317 = scalar_select %p316, %s315, 1
        %s318 = smul.addr %s317, 8
        %s319 = scalar_lea.vmem %s3, %s318
        %s320 = ssub.s32 %s16, 1
        %p321 = scmp.gt.s32.totalorder %s320, 0
        %s322 = scalar_select %p321, %s320, 0
        %s323 = smul.u32 2, %s322
        %p324 = scmp.eq.s32.totalorder %s16, 0
        // Predicated region
        $region37: #{misclassification_loss.1} parent=35 // pred_check
          %p325 = pneg %p324
        $region38: #{misclassification_loss.1} parent=35 // pred_check_branch
          %327 = sbr.rel (%p325) target = $region40
        $region39: #{misclassification_loss.1} parent=35 // pred_region
          %vm328 = vcmask 57344
          %329 = vst.msk [vmem:[#allocation2] sm:$0x1] %vm328, 0.0
          %330 = vst.msk [vmem:[#allocation3] sm:$0x1] %vm328, 0.0
          %vm331 = vcmask 0
          %332 = vst.msk [vmem:[#allocation4] sm:$0x1] %vm331, 0.0
        $region40: #{misclassification_loss.1} parent=35 // pred_fallthru
          _
        %p333 = scmp.lt.s32.totalorder %s16, 1
        // Predicated region
        $region41: #{misclassification_loss.1} parent=35 // pred_check
          %p334 = pneg %p333
        $region42: #{misclassification_loss.1} parent=35 // pred_check_branch
          %336 = sbr.rel (%p334) target = $region44
        $region43: #{misclassification_loss.1} parent=35 // pred_region
          %s337 = smul.u32 %s16, 4
          %v338 = vlaneseq
          %v339 = vshrl.u32 %v338, 7
          %v340 = vstv %s337
          %v341 = vadd.s32 %v340, %v339
          %vm342 = vcmp.lt.s32.totalorder %v341, 4
          %v343 = vld [vmem:[%s285] sm:$0xf]
          %v344 = vmul.f32 %v343, 1.442695
          %v345 = vpow.pop %v344
          %v346 = vld [vmem:[#allocation2] sm:$0x1]
          %v347 = vsel %vm342, 1, 0
          %vm348 = vcmp.eq.s32.totalorder %v347, 1
          %v349 = vsel %vm348, %v345, 0.0
          %vm350 = vcmask 60416
          %v351 = vsel %vm350, %v349, 0.0
          %v352 = vrot.slane %v351, 4
          %v353 = vadd.f32 %v351, %v352
          %v354 = vrot.slane %v353, 2
          %v355 = vadd.f32 %v353, %v354
          %v356 = vrot.slane %v355, 1
          %v357 = vadd.f32 %v355, %v356
          %v358 = vadd.f32 %v346, %v357
          %vm359 = vcmask 57344
          %360 = vst.msk [vmem:[#allocation2] sm:$0x1] %vm359, %v358
        $region44: #{misclassification_loss.1} parent=35 // pred_fallthru
          _
        %p361 = scmp.ge.s32.totalorder %s16, 1
        // Predicated region
        $region45: #{misclassification_loss.1} parent=35 // pred_check
          %p362 = pneg %p361
        $region46: #{misclassification_loss.1} parent=35 // pred_check_branch
          %364 = sbr.rel (%p362) target = $region48
        $region47: #{misclassification_loss.1} parent=35 // pred_region
          %s365 = ssub.s32 %s16, 1
          %s366 = smul.u32 %s365, 16
          %v367 = vlaneseq
          %v368 = vshrl.u32 %v367, 7
          %v369 = vadd.s32 %v368, 8
          %v370 = vstv %s366
          %v371 = vadd.s32 %v370, %v368
          %v372 = vadd.s32 %v370, %v369
          %vm373 = vcmp.ge.s32.totalorder %v371, 12
          %vm374 = vcmp.ge.s32.totalorder %v372, 12
          %vm375 = vcmp.lt.s32.totalorder %v371, 16
          %vm376 = vcmp.lt.s32.totalorder %v372, 16
          %vm377 = vmand %vm373, %vm375
          %vm378 = vmand %vm374, %vm376
          %v379 = vld [vmem:[%s295] sm:$0xff]
          %v380 = vld [vmem:[%s295 + $0x8] sm:$0xff]
          %v381 = vld [vmem:[#allocation3] sm:$0x1]
          %v382 = vsel %vm377, 1, 0
          %v383 = vsel %vm378, 1, 0
          %vm384 = vcmp.eq.s32.totalorder %v382, 1
          %vm385 = vcmp.eq.s32.totalorder %v383, 1
          %v386 = vsel %vm384, %v379, 0.0
          %v387 = vsel %vm385, %v380, 0.0
          %vm388 = vcmask 64512
          %v389 = vsel %vm388, %v386, 0.0
          %v390 = vsel %vm388, %v387, 0.0
          %v391 = vadd.f32 %v389, %v390
          %v392 = vrot.slane %v391, 4
          %v393 = vadd.f32 %v391, %v392
          %v394 = vrot.slane %v393, 2
          %v395 = vadd.f32 %v393, %v394
          %v396 = vrot.slane %v395, 1
          %v397 = vadd.f32 %v395, %v396
          %v398 = vadd.f32 %v381, %v397
          %vm399 = vcmask 57344
          %400 = vst.msk [vmem:[#allocation3] sm:$0x1] %vm399, %v398
          %v401 = vld [vmem:[%s307] sm:$0xff]
          %v402 = vld [vmem:[%s307 + $0x8] sm:$0xff]
          %v403 = vsel %vm384, %v401, 0.0
          %v404 = vsel %vm385, %v402, 0.0
          %v405 = vld [vmem:[%s319] sm:$0xff]
          %v406 = vld [vmem:[%s319 + $0x8] sm:$0xff]
          %v407 = vsel %vm384, %v405, 1.0
          %v408 = vsel %vm385, %v406, 1.0
          %vm409 = vcmask 261120
          %v411 = vsel %vm409, %v403, 0
          %v414 = vsel %vm409, %v404, 0
          %416 = vmatprep.subr.mxu0 0.0
          %417 = vmatpush1.msra.mxu0 0.0
          %418 = vmatprep.subr.mxu0 0.0
          %419 = vmatpush1.msra.mxu0 0.0
          %420 = vmatprep.subr.mxu0 0.0
          %421 = vmatpush1.msra.mxu0 0.0
          %422 = vmatprep.subr.mxu0 0.0
          %423 = vmatpush1.msra.mxu0 0.0
          %424 = vmatprep.subr.mxu0 0.0
          %425 = vmatpush1.msra.mxu0 0.0
          %426 = vmatprep.subr.mxu0 0.0
          %427 = vmatpush1.msra.mxu0 0.0
          %428 = vmatprep.subr.mxu0 0.0
          %429 = vmatpush1.msra.mxu0 0.0
          %430 = vmatprep.subr.mxu0 0.0
          %431 = vmatpush1.msra.mxu0 0.0
          %432 = vmatprep.subr.mxu0 0.0
          %433 = vmatpush1.msra.mxu0 0.0
          %434 = vmatprep.subr.mxu0 0.0
          %435 = vmatpush1.msra.mxu0 0.0
          %436 = vmatprep.subr.mxu0 0.0
          %437 = vmatpush1.msra.mxu0 0.0
          %438 = vmatprep.subr.mxu0 0.0
          %439 = vmatpush1.msra.mxu0 0.0
          %440 = vmatprep.subr.mxu0 0.0
          %441 = vmatpush1.msra.mxu0 1.0
          %442 = vmatprep.subr.mxu0 0.0
          %443 = vmatpush1.msra.mxu0 1.0
          %444 = vmatprep.subr.mxu0 0.0
          %445 = vmatpush1.msra.mxu0 1.0
          %446 = vmatprep.subr.mxu0 0.0
          %447 = vmatpush1.msra.mxu0 1.0
          %448 = vmatprep.subr.mxu0 0.0
          %449 = vmatpush2.msra.mxu0 0.0
          %450 = vmatprep.subr.mxu0 0.0
          %451 = vmatpush2.msra.mxu0 0.0
          %452 = vmatprep.subr.mxu0 0.0
          %453 = vmatpush2.msra.mxu0 0.0
          %454 = vmatprep.subr.mxu0 0.0
          %455 = vmatpush2.msra.mxu0 0.0
          %456 = vmatprep.subr.mxu0 0.0
          %457 = vmatpush2.msra.mxu0 0.0
          %458 = vmatprep.subr.mxu0 0.0
          %459 = vmatpush2.msra.mxu0 0.0
          %460 = vmatprep.subr.mxu0 0.0
          %461 = vmatpush2.msra.mxu0 0.0
          %462 = vmatprep.subr.mxu0 0.0
          %463 = vmatpush2.msra.mxu0 0.0
          %464 = vmatprep.subr.mxu0 0.0
          %465 = vmatpush2.msra.mxu0 0.0
          %466 = vmatprep.subr.mxu0 0.0
          %467 = vmatpush2.msra.mxu0 0.0
          %468 = vmatprep.subr.mxu0 0.0
          %469 = vmatpush2.msra.mxu0 0.0
          %470 = vmatprep.subr.mxu0 0.0
          %471 = vmatpush2.msra.mxu0 0.0
          %472 = vmatprep.subr.mxu0 0.0
          %473 = vmatpush2.msra.mxu0 0.0
          %474 = vmatprep.subr.mxu0 0.0
          %475 = vmatpush2.msra.mxu0 0.0
          %476 = vmatprep.subr.mxu0 0.0
          %477 = vmatpush2.msra.mxu0 0.0
          %478 = vmatprep.subr.mxu0 0.0
          %479 = vmatpush2.msra.mxu0 0.0
          %480 = vmatprep.mubr.f32.mxu0 0.0
          %481 = vmatmul.mubr.f32.gmra.mxu0 %v411
          %v482 = vpop.f32.mrf.mxu0
          %v483 = vadd.f32 0.0, %v482
          %v484 = vpop.f32.mrf.mxu0
          %485 = vmatprep.mubr.f32.mxu0 0.0
          %486 = vmatmul.mubr.f32.gmra.mxu0 %v414
          %v487 = vpop.f32.mrf.mxu0
          %v488 = vadd.f32 0.0, %v487
          %v489 = vpop.f32.mrf.mxu0
          %490 = vdwg.mxu0
          %vm491 = vcmp.eq.f32.partialorder %v483, 0.0
          %vm492 = vcmp.eq.f32.partialorder %v488, 0.0
          %v493 = vsel %vm491, 1.0, %v483
          %v494 = vsel %vm492, 1.0, %v488
          %v495 = vrcp.pop %v493
          %v496 = vrcp.pop %v494
          %v497 = vmul.f32 %v493, %v495
          %v498 = vmul.f32 %v494, %v496
          %v499 = vsub.f32 2.0, %v497
          %v500 = vsub.f32 2.0, %v498
          %v501 = vmul.f32 %v495, %v499
          %v502 = vmul.f32 %v496, %v500
          %v503 = vadd.f32 %v407, 1e-14
          %v504 = vadd.f32 %v408, 1e-14
          %v505 = vlog2.pop %v503
          %v506 = vmul.f32 %v505, 0.6931472
          %v507 = vlog2.pop %v504
          %v508 = vmul.f32 %v507, 0.6931472
          %v509 = vmul.f32 %v403, %v506
          %v510 = vmul.f32 %v404, %v508
          %v512 = vsel %vm409, %v509, 0
          %v515 = vsel %vm409, %v510, 0
          %517 = vmatprep.subr.mxu0 0.0
          %518 = vmatpush1.msra.mxu0 0.0
          %519 = vmatprep.subr.mxu0 0.0
          %520 = vmatpush1.msra.mxu0 0.0
          %521 = vmatprep.subr.mxu0 0.0
          %522 = vmatpush1.msra.mxu0 0.0
          %523 = vmatprep.subr.mxu0 0.0
          %524 = vmatpush1.msra.mxu0 0.0
          %525 = vmatprep.subr.mxu0 0.0
          %526 = vmatpush1.msra.mxu0 0.0
          %527 = vmatprep.subr.mxu0 0.0
          %528 = vmatpush1.msra.mxu0 0.0
          %529 = vmatprep.subr.mxu0 0.0
          %530 = vmatpush1.msra.mxu0 0.0
          %531 = vmatprep.subr.mxu0 0.0
          %532 = vmatpush1.msra.mxu0 0.0
          %533 = vmatprep.subr.mxu0 0.0
          %534 = vmatpush1.msra.mxu0 0.0
          %535 = vmatprep.subr.mxu0 0.0
          %536 = vmatpush1.msra.mxu0 0.0
          %537 = vmatprep.subr.mxu0 0.0
          %538 = vmatpush1.msra.mxu0 0.0
          %539 = vmatprep.subr.mxu0 0.0
          %540 = vmatpush1.msra.mxu0 0.0
          %541 = vmatprep.subr.mxu0 0.0
          %542 = vmatpush1.msra.mxu0 1.0
          %543 = vmatprep.subr.mxu0 0.0
          %544 = vmatpush1.msra.mxu0 1.0
          %545 = vmatprep.subr.mxu0 0.0
          %546 = vmatpush1.msra.mxu0 1.0
          %547 = vmatprep.subr.mxu0 0.0
          %548 = vmatpush1.msra.mxu0 1.0
          %549 = vmatprep.subr.mxu0 0.0
          %550 = vmatpush2.msra.mxu0 0.0
          %551 = vmatprep.subr.mxu0 0.0
          %552 = vmatpush2.msra.mxu0 0.0
          %553 = vmatprep.subr.mxu0 0.0
          %554 = vmatpush2.msra.mxu0 0.0
          %555 = vmatprep.subr.mxu0 0.0
          %556 = vmatpush2.msra.mxu0 0.0
          %557 = vmatprep.subr.mxu0 0.0
          %558 = vmatpush2.msra.mxu0 0.0
          %559 = vmatprep.subr.mxu0 0.0
          %560 = vmatpush2.msra.mxu0 0.0
          %561 = vmatprep.subr.mxu0 0.0
          %562 = vmatpush2.msra.mxu0 0.0
          %563 = vmatprep.subr.mxu0 0.0
          %564 = vmatpush2.msra.mxu0 0.0
          %565 = vmatprep.subr.mxu0 0.0
          %566 = vmatpush2.msra.mxu0 0.0
          %567 = vmatprep.subr.mxu0 0.0
          %568 = vmatpush2.msra.mxu0 0.0
          %569 = vmatprep.subr.mxu0 0.0
          %570 = vmatpush2.msra.mxu0 0.0
          %571 = vmatprep.subr.mxu0 0.0
          %572 = vmatpush2.msra.mxu0 0.0
          %573 = vmatprep.subr.mxu0 0.0
          %574 = vmatpush2.msra.mxu0 0.0
          %575 = vmatprep.subr.mxu0 0.0
          %576 = vmatpush2.msra.mxu0 0.0
          %577 = vmatprep.subr.mxu0 0.0
          %578 = vmatpush2.msra.mxu0 0.0
          %579 = vmatprep.subr.mxu0 0.0
          %580 = vmatpush2.msra.mxu0 0.0
          %581 = vmatprep.mubr.f32.mxu0 0.0
          %582 = vmatmul.mubr.f32.gmra.mxu0 %v512
          %v583 = vpop.f32.mrf.mxu0
          %v584 = vadd.f32 0.0, %v583
          %v585 = vpop.f32.mrf.mxu0
          %586 = vmatprep.mubr.f32.mxu0 0.0
          %587 = vmatmul.mubr.f32.gmra.mxu0 %v515
          %v588 = vpop.f32.mrf.mxu0
          %v589 = vadd.f32 0.0, %v588
          %v590 = vpop.f32.mrf.mxu0
          %591 = vdwg.mxu0
          %v592 = vld [vmem:[#allocation4] sm:$0x1]
          %v593 = vsub.f32 0.0, %v501
          %v594 = vsub.f32 0.0, %v502
          %v595 = vmul.f32 %v593, %v584
          %v596 = vmul.f32 %v594, %v589
          %vm597 = vcmask 7168
          %v598 = vsel %vm597, %v595, 0.0
          %v599 = vsel %vm597, %v596, 0.0
          %v600 = vadd.f32 %v598, %v599
          %601 = vadd.xlane.f32.xlu0 %v600
          %v602 = vpop.xlane.xlu0 %601
          %v603 = vrot.slane %v602, 4
          %v604 = vadd.f32 %v602, %v603
          %v605 = vrot.slane %v604, 2
          %v606 = vadd.f32 %v604, %v605
          %v607 = vrot.slane %v606, 1
          %v608 = vadd.f32 %v606, %v607
          %s609 = vtos %v608
          %v610 = vstv %s609
          %v611 = vadd.f32 %v592, %v610
          %vm612 = vcmask 0
          %613 = vst.msk [vmem:[#allocation4] sm:$0x1] %vm612, %v611
        $region48: #{misclassification_loss.1} parent=35 // pred_fallthru
          _
        %p614 = scmp.eq.s32.totalorder %s16, 1
        // Predicated region
        $region49: #{misclassification_loss.1} parent=35 // pred_check
          %p615 = pneg %p614
        $region50: #{misclassification_loss.1} parent=35 // pred_check_branch
          %617 = sbr.rel (%p615) target = $region52
        $region51: #{misclassification_loss.1} parent=35 // pred_region
          %v618 = vld [vmem:[#allocation2] sm:$0x1]
          %v619 = vmul.f32 %v618, 0.25
          %v620 = vld [vmem:[#allocation3] sm:$0x1]
          %v621 = vmul.f32 %v619, %v620
          %vm622 = vcmask 57344
          %v623 = vsel %vm622, %v621, 0.0
          %624 = vadd.xlane.f32.xlu0 %v623
          %v625 = vpop.xlane.xlu0 %624
          %v626 = vrot.slane %v625, 4
          %v627 = vadd.f32 %v625, %v626
          %v628 = vrot.slane %v627, 2
          %v629 = vadd.f32 %v627, %v628
          %v630 = vrot.slane %v629, 1
          %v631 = vadd.f32 %v629, %v630
          %s632 = vtos %v631
          %s633 = ssub.f32 0.0, %s632
          %s634 = smul.f32 %s633, 0.25
          %v635 = vld [vmem:[#allocation4] sm:$0x1]
          %v636 = vadd.f32 %v635, 0.0
          %s637 = vtos %v636
          %s638 = smul.f32 %s637, 0.25
          %s639 = smul.f32 %s638, 0.1
          %s640 = sadd.f32 %s634, %s639
          %s641 = scalar_lea.smem [#allocation5], 0
          %642 = sst [smem:[%s641]] %s640
        $region52: #{misclassification_loss.1} parent=35 // pred_fallthru
          _
        // Predicated region
        $region53: #{misclassification_loss.1} parent=35 // pred_check
          %p643 = pneg %p155
        $region54: #{misclassification_loss.1} parent=35 // pred_check_branch
          %645 = sbr.rel (%p643) target = $region56
        $region55: #{misclassification_loss.1} parent=35 // pred_region
          %s647 = ssub.s32 16, 16
          %648 = vsyncadd [#allocation6], %s647
          %651 = dma.smem_to_hbm [#allocation5], 16, %s4, [#allocation6]
        $region56: #{misclassification_loss.1} parent=35 // pred_fallthru
          _
        // Predicated region
        $region57: #{misclassification_loss.1} parent=35 // pred_check
          %p652 = pneg %p155
        $region58: #{misclassification_loss.1} parent=35 // pred_check_branch
          %654 = sbr.rel (%p652) target = $region60
        $region59: #{misclassification_loss.1} parent=35 // pred_region
          %655 = dma.done [#allocation6], 16
        $region60: #{misclassification_loss.1} parent=35 // pred_fallthru
          _
        %656 = sfence
      $region36: #{misclassification_loss.1} parent=5 // pred_fallthru
        _
      %p657 = scmp.le.s32.totalorder 2, %s11
      // Predicated region
      $region61: #{misclassification_loss.1} parent=5 // pred_check
        %p658 = pneg %p657
      $region62: #{misclassification_loss.1} parent=5 // pred_check_branch
        %660 = sbr.rel (%p658) target = $region64
      $region63: #{misclassification_loss.1} parent=5 // pred_region
        %s661 = ssub.s32 %s11, 2
      $region64: #{misclassification_loss.1} parent=5 // pred_fallthru
        _
    $region6: #{misclassification_loss.1} parent=1 // loop_footer
      %s15 = sadd.s32 1, %s11
    $region7: #{misclassification_loss.1} parent=1 // loop_footer_branch
      %10 = sbr.rel target = $region3
    $region8: #{misclassification_loss.1} parent=1 // loop_exit
      _
    %662 = vsyncpa [#allocation6], 1
    %s663 = scalar_lea.sflag [#allocation6], 1
    %664 = vsyncpa %s663, 1

</llo_original>
